<compile_context>
chip_gen: v5e
topology: v5e:2x2
jax: 0.10.0
libtpu: 0.0.40
codegen_flags: <defaults>
</compile_context>

<pallas_src>
import functools

import jax
import jax.numpy as jnp
from jax.experimental import pallas as pl
from jax.experimental.pallas import tpu as pltpu


def _round_up(x, m):
    return (x + m - 1) // m * m


_VMEM_LIMIT = 32 * 1024 * 1024  # safe on v7x (64 MiB physical) and v5e/v6e


# ----------------------------- Pallas kernels ------------------------------

def _mm_kernel(a_ref, b_ref, o_ref, acc_ref):
    @pl.when(pl.program_id(2) == 0)
    def _init():
        acc_ref[...] = jnp.zeros_like(acc_ref)

    acc_ref[...] += jnp.dot(a_ref[...], b_ref[...],
                            preferred_element_type=jnp.float32)

    @pl.when(pl.program_id(2) == pl.num_programs(2) - 1)
    def _out():
        o_ref[...] = acc_ref[...].astype(o_ref.dtype)


def _mm_bias_kernel(a_ref, b_ref, bias_ref, o_ref, acc_ref):
    @pl.when(pl.program_id(2) == 0)
    def _init():
        acc_ref[...] = jnp.zeros_like(acc_ref)

    acc_ref[...] += jnp.dot(a_ref[...], b_ref[...],
                            preferred_element_type=jnp.float32)

    @pl.when(pl.program_id(2) == pl.num_programs(2) - 1)
    def _out():
        o_ref[...] = (acc_ref[...] + bias_ref[...]).astype(o_ref.dtype)


def _mm_stats_kernel(a_ref, b_ref, o_ref, s_ref, q_ref, acc_ref):
    """Matmul with fused per-channel sum/sumsq epilogue (for BatchNorm)."""
    @pl.when(pl.program_id(2) == 0)
    def _init():
        acc_ref[...] = jnp.zeros_like(acc_ref)

    acc_ref[...] += jnp.dot(a_ref[...], b_ref[...],
                            preferred_element_type=jnp.float32)

    @pl.when(pl.program_id(2) == pl.num_programs(2) - 1)
    def _out():
        acc = acc_ref[...]
        o_ref[...] = acc.astype(o_ref.dtype)
        cs = jnp.sum(acc, axis=0, keepdims=True)          # (1, tn) f32
        cq = jnp.sum(acc * acc, axis=0, keepdims=True)    # (1, tn) f32
        # Replicate across the 8-row block (kept lane/sublane aligned); the
        # wrapper sums all rows and multiplies by 1/8 (exact in f32).
        s_ref[...] = jnp.broadcast_to(cs, s_ref.shape)
        q_ref[...] = jnp.broadcast_to(cq, q_ref.shape)


def _bn_apply_kernel(x_ref, scale_ref, shift_ref, o_ref, *, relu):
    y = x_ref[...].astype(jnp.float32) * scale_ref[...] + shift_ref[...]
    if relu:
        y = jnp.maximum(y, 0.0)
    o_ref[...] = y.astype(o_ref.dtype)


def _bn_apply_res_kernel(x_ref, res_ref, scale_ref, shift_ref, o_ref):
    y = (x_ref[...].astype(jnp.float32) * scale_ref[...] + shift_ref[...]
         + res_ref[...].astype(jnp.float32))
    o_ref[...] = jnp.maximum(y, 0.0).astype(o_ref.dtype)


def _gap_kernel(x_ref, o_ref):
    @pl.when(pl.program_id(0) == 0)
    def _init():
        o_ref[...] = jnp.zeros_like(o_ref)

    o_ref[...] += jnp.sum(x_ref[...].astype(jnp.float32), axis=1)


# ------------------------------- wrappers -----------------------------------

def matmul_pallas(a, b, bias=None, out_dtype=jnp.bfloat16, stats=False):
    """(M,K) @ (K,N) [+bias].  bf16 MXU inputs, f32 accumulation.

    K and N must be multiples of 128 (weights are pre-padded at init).
    If stats=True also returns per-column (sum, sumsq) of the f32 result,
    computed in the matmul epilogue from the resident accumulator.
    """
    m, k = a.shape
    k2, n = b.shape
    assert k == k2 and k % 128 == 0 and n % 128 == 0
    a = a.astype(jnp.bfloat16)
    b = b.astype(jnp.bfloat16)

    # --- tile selection -----------------------------------------------------
    mp = _round_up(m, 16)
    if mp >= 512:
        tm = 256
    elif mp >= 256:
        tm = 128
    elif mp >= 128:
        tm = 64          # >= 2 parallel M blocks -> both v7x TensorCores busy
    else:
        tm = mp          # tiny-M GEMV: single block
    mp = _round_up(m, tm)
    if mp != m:
        a = jnp.pad(a, ((0, mp - m), (0, 0)))

    tn = n if n <= 512 else 512
    if n % tn != 0:
        tn = 256 if n % 256 == 0 else 128

    # full-K tiles for the tiny-M weight-bandwidth matmuls; cap the weight
    # block at ~4 MiB so double-buffering stays well under VMEM on all gens.
    units = k // 128
    d = units
    while d > 1 and 128 * d * tn * 2 > 4 * 1024 * 1024:
        if d % 2 == 0:
            d //= 2
        elif d % 3 == 0:
            d //= 3
        else:
            break
    tk = 128 * d

    grid = (mp // tm, n // tn, k // tk)
    in_specs = [
        pl.BlockSpec((tm, tk), lambda i, j, kk: (i, kk)),
        pl.BlockSpec((tk, tn), lambda i, j, kk: (kk, j)),
    ]
    args = [a, b]
    if bias is not None:
        in_specs.append(pl.BlockSpec((1, tn), lambda i, j, kk: (0, j)))
        args.append(bias.reshape(1, n).astype(jnp.float32))

    if stats:
        assert bias is None
        kern = _mm_stats_kernel
        out_shape = (jax.ShapeDtypeStruct((mp, n), out_dtype),
                     jax.ShapeDtypeStruct((grid[0] * 8, n), jnp.float32),
                     jax.ShapeDtypeStruct((grid[0] * 8, n), jnp.float32))
        out_specs = (pl.BlockSpec((tm, tn), lambda i, j, kk: (i, j)),
                     pl.BlockSpec((8, tn), lambda i, j, kk: (i, j)),
                     pl.BlockSpec((8, tn), lambda i, j, kk: (i, j)))
    else:
        kern = _mm_bias_kernel if bias is not None else _mm_kernel
        out_shape = jax.ShapeDtypeStruct((mp, n), out_dtype)
        out_specs = pl.BlockSpec((tm, tn), lambda i, j, kk: (i, j))

    res = pl.pallas_call(
        kern,
        out_shape=out_shape,
        grid_spec=pltpu.PrefetchScalarGridSpec(
            num_scalar_prefetch=0,
            grid=grid,
            in_specs=in_specs,
            out_specs=out_specs,
            scratch_shapes=[pltpu.VMEM((tm, tn), jnp.float32)],
        ),
        compiler_params=pltpu.CompilerParams(
            dimension_semantics=("parallel", "parallel", "arbitrary"),
            vmem_limit_bytes=_VMEM_LIMIT,
        ),
    )(*args)

    if stats:
        out, s_blk, q_blk = res
        out = out[:m] if mp != m else out
        # each (i) block wrote 8 identical copies of its partial sum
        s = jnp.sum(s_blk, axis=0, keepdims=True) * 0.125
        q = jnp.sum(q_blk, axis=0, keepdims=True) * 0.125
        return out, s, q
    return res[:m] if mp != m else res


def conv2d_stats(x, cw, stride, padding):
    """x: (N,H,W,Cin) f32/bf16; cw: {'w': (Kp,Cout) bf16, 'k': (kh,kw)}.

    Returns (y_nhwc bf16, col_sum (1,Cout) f32, col_sumsq (1,Cout) f32).
    """
    n, h, wd, cin = x.shape
    kh, kw = cw["k"]
    w_mat = cw["w"]
    kp, cout = w_mat.shape
    k_true = kh * kw * cin
    xp = x
    if padding:
        xp = jnp.pad(x, ((0, 0), (padding, padding), (padding, padding), (0, 0)))
    oh = (h + 2 * padding - kh) // stride + 1
    ow = (wd + 2 * padding - kw) // stride + 1
    cols = []
    for i in range(kh):
        for j in range(kw):
            cols.append(xp[:, i:i + stride * oh:stride, j:j + stride * ow:stride, :])
    if kp != k_true:  # fold K padding into the single concatenate
        cols.append(jnp.zeros((n, oh, ow, kp - k_true), xp.dtype))
    patches = jnp.concatenate(cols, axis=-1).astype(jnp.bfloat16)
    a = patches.reshape(n * oh * ow, kp)
    out, s, q = matmul_pallas(a, w_mat, stats=True, out_dtype=jnp.bfloat16)
    return out.reshape(n, oh, ow, cout), s, q


def bn_apply(x, s, q, gamma, beta, relu=True, residual=None):
    """Train-mode BN (biased batch variance, eps=1e-5) applied from fused
    per-channel stats, with optional residual add + ReLU.  bf16 in/out."""
    n, h, w, c = x.shape
    rows = n * h * w
    cnt = float(rows)
    mean = s / cnt
    var = jnp.maximum(q / cnt - mean * mean, 0.0)   # clamp cancellation noise
    scale = gamma * jax.lax.rsqrt(var + 1e-5)
    shift = beta - mean * scale

    x2 = x.reshape(rows, c)
    if rows > 1024:
        rt = 1024
        rp = _round_up(rows, rt)
    else:
        rp = _round_up(rows, 8)
        rt = rp // 2 if (rp % 16 == 0 and rp >= 16) else rp  # >=2 blocks for v7x
    if rp != rows:
        x2 = jnp.pad(x2, ((0, rp - rows), (0, 0)))
    nst = rp // rt

    if residual is None:
        out = pl.pallas_call(
            functools.partial(_bn_apply_kernel, relu=relu),
            out_shape=jax.ShapeDtypeStruct((rp, c), jnp.bfloat16),
            grid=(nst,),
            in_specs=[pl.BlockSpec((rt, c), lambda i: (i, 0)),
                      pl.BlockSpec((1, c), lambda i: (0, 0)),
                      pl.BlockSpec((1, c), lambda i: (0, 0))],
            out_specs=pl.BlockSpec((rt, c), lambda i: (i, 0)),
            compiler_params=pltpu.CompilerParams(
                dimension_semantics=("parallel",),
                vmem_limit_bytes=_VMEM_LIMIT,
            ),
        )(x2, scale, shift)
    else:
        r2 = residual.reshape(rows, c).astype(jnp.bfloat16)
        if rp != rows:
            r2 = jnp.pad(r2, ((0, rp - rows), (0, 0)))
        out = pl.pallas_call(
            _bn_apply_res_kernel,
            out_shape=jax.ShapeDtypeStruct((rp, c), jnp.bfloat16),
            grid=(nst,),
            in_specs=[pl.BlockSpec((rt, c), lambda i: (i, 0)),
                      pl.BlockSpec((rt, c), lambda i: (i, 0)),
                      pl.BlockSpec((1, c), lambda i: (0, 0)),
                      pl.BlockSpec((1, c), lambda i: (0, 0))],
            out_specs=pl.BlockSpec((rt, c), lambda i: (i, 0)),
            compiler_params=pltpu.CompilerParams(
                dimension_semantics=("parallel",),
                vmem_limit_bytes=_VMEM_LIMIT,
            ),
        )(x2, r2, scale, shift)

    return out[:rows].reshape(n, h, w, c)


def conv_bn(x, cw, gamma, beta, stride, padding, relu=True, residual=None):
    out, s, q = conv2d_stats(x, cw, stride, padding)
    return bn_apply(out, s, q, gamma, beta, relu=relu, residual=residual)


def global_avg_pool(x):
    n, h, w, c = x.shape
    hw = h * w
    x3 = x.reshape(n, hw, c)
    t = _round_up(hw, 8) if hw <= 1024 else 512
    hwp = _round_up(hw, t)
    if hwp != hw:
        x3 = jnp.pad(x3, ((0, 0), (0, hwp - hw), (0, 0)))
    out = pl.pallas_call(
        _gap_kernel,
        out_shape=jax.ShapeDtypeStruct((n, c), jnp.float32),
        grid=(hwp // t,),
        in_specs=[pl.BlockSpec((n, t, c), lambda i: (0, i, 0))],
        out_specs=pl.BlockSpec((n, c), lambda i: (0, 0)),
        compiler_params=pltpu.CompilerParams(
            dimension_semantics=("arbitrary",),
            vmem_limit_bytes=_VMEM_LIMIT,
        ),
    )(x3)
    return out / float(hw)


# ------------------------- ResNet-34 parameters -----------------------------

# (out_channels, num_blocks, first_stride) for layer1..layer4
_RESNET34_CFG = [(64, 3, 1), (128, 4, 2), (256, 6, 2), (512, 3, 2)]


def _cpad(c):
    """Lane-dense channel count (pad 64-channel layers to 128)."""
    return _round_up(c, 128)


def init_params(key):
    keys = iter(jax.random.split(key, 80))

    def nk():
        return next(keys)

    def conv_w(kh, kw, cin, cout, cin_store=None, cout_store=None):
        cin_s = cin if cin_store is None else cin_store
        cout_s = cout if cout_store is None else cout_store
        scale = (kh * kw * cin) ** -0.5
        w = jax.random.normal(nk(), (kh, kw, cin, cout), jnp.float32) * scale
        w = jnp.pad(w, ((0, 0), (0, 0), (0, cin_s - cin), (0, cout_s - cout)))
        k_true = kh * kw * cin_s
        kp = _round_up(k_true, 128)
        w_mat = jnp.pad(w.reshape(k_true, cout_s), ((0, kp - k_true), (0, 0)))
        return {"w": w_mat.astype(jnp.bfloat16), "k": (kh, kw)}

    def bn_p(c_store):
        return (jnp.ones((1, c_store), jnp.float32),
                jnp.zeros((1, c_store), jnp.float32))

    params = {
        "conv1": conv_w(7, 7, 3, 64, cout_store=_cpad(64)),
        "bn1": bn_p(_cpad(64)),
        "layers": [],
    }
    in_ch = 64
    for out_ch, nblocks, stride in _RESNET34_CFG:
        layer = []
        for b in range(nblocks):
            s = stride if b == 0 else 1
            blk = {
                "stride": s,
                "conv1": conv_w(3, 3, in_ch, out_ch,
                                cin_store=_cpad(in_ch), cout_store=_cpad(out_ch)),
                "bn1": bn_p(_cpad(out_ch)),
                "conv2": conv_w(3, 3, out_ch, out_ch,
                                cin_store=_cpad(out_ch), cout_store=_cpad(out_ch)),
                "bn2": bn_p(_cpad(out_ch)),
            }
            if s != 1 or in_ch != out_ch:
                blk["down"] = (conv_w(1, 1, in_ch, out_ch,
                                      cin_store=_cpad(in_ch),
                                      cout_store=_cpad(out_ch)),) + bn_p(_cpad(out_ch))
            layer.append(blk)
            in_ch = out_ch
        params["layers"].append(layer)

    # fc1 = nn.Linear(2048, 2048); weight stored as (in, out) bf16 for x @ W.
    params["fc1_w"] = (jax.random.normal(nk(), (2048, 2048), jnp.float32)
                       * (2048 ** -0.5)).astype(jnp.bfloat16)
    params["fc1_b"] = jax.random.normal(nk(), (2048,), jnp.float32) * 0.01
    return params


# ------------------------------- forward ------------------------------------

def basic_block(x, blk):
    identity = x
    out = conv_bn(x, blk["conv1"], *blk["bn1"],
                  stride=blk["stride"], padding=1, relu=True)
    if "down" in blk:
        dw, dg, db = blk["down"]
        identity = conv_bn(x, dw, dg, db,
                           stride=blk["stride"], padding=0, relu=False)
    # bn2 + residual add + ReLU fused in a single tiled pass.
    return conv_bn(out, blk["conv2"], *blk["bn2"],
                   stride=1, padding=1, relu=True, residual=identity)


def my_resnet34_forward(params, x_nchw):
    x = jnp.transpose(x_nchw, (0, 2, 3, 1)).astype(jnp.float32)   # NCHW -> NHWC
    x = conv_bn(x, params["conv1"], *params["bn1"], stride=2, padding=3, relu=True)
    # backbone.maxpool was replaced by nn.Identity() -> no pooling here.
    for layer in params["layers"]:
        for blk in layer:
            x = basic_block(x, blk)
    h = global_avg_pool(x)                     # (N, 512); backbone.fc is Identity
    h = h.reshape(h.shape[0], -1)              # h.view(h.size(0), -1)
    # TODO(synk): the reference module is shape-inconsistent (ResNet34 features=512
    # vs fc1 in_features=2048).  Using only the first 512 rows of fc1_w is
    # mathematically identical to zero-padding the feature vector to 2048 and
    # avoids 4x wasted FLOPs / weight reads.
    y = matmul_pallas(h, params["fc1_w"][:512, :], bias=params["fc1_b"],
                      out_dtype=jnp.float32)
    return y


# --------------------------------- main --------------------------------------

if __name__ == "__main__":
    key = jax.random.PRNGKey(0)
    pkey, xkey = jax.random.split(key)
    params = init_params(pkey)
    # Small NCHW input consistent with a 3-channel ImageNet-style model.
    x = jax.random.normal(xkey, (2, 3, 16, 16), jnp.float32)
    y = my_resnet34_forward(params, x)
    jax.block_until_ready(y)
    assert y.shape == (2, 2048) and y.dtype == jnp.float32
    print("KERNEL_OK")
</pallas_src>

<mosaic_0001>
module attributes {stable_mosaic.version = 11 : i64} {
  func.func @_mm_stats_kernel(%arg0: i32, %arg1: i32, %arg2: i32, %arg3: memref<64x256xbf16, #tpu.memory_space<vmem>>, %arg4: memref<256x128xbf16, #tpu.memory_space<vmem>>, %arg5: memref<64x128xbf16, #tpu.memory_space<vmem>>, %arg6: memref<8x128xf32, #tpu.memory_space<vmem>>, %arg7: memref<8x128xf32, #tpu.memory_space<vmem>>, %arg8: memref<64x128xf32, #tpu.memory_space<vmem>>) attributes {dimension_semantics = [#tpu.dimension_semantics<parallel>, #tpu.dimension_semantics<parallel>, #tpu.dimension_semantics<arbitrary>], iteration_bounds = array<i64: 2, 1, 1>, scalar_prefetch = 0 : i64, scratch_operands = 1 : i64, tpu.core_type = #tpu.core_type<tc>, window_params = [{transform_indices = @transform_0, window_bounds = array<i64: 64, 256>}, {transform_indices = @transform_1, window_bounds = array<i64: 256, 128>}, {transform_indices = @transform_2, window_bounds = array<i64: 64, 128>}, {transform_indices = @transform_3, window_bounds = array<i64: 8, 128>}, {transform_indices = @transform_4, window_bounds = array<i64: 8, 128>}]} {
    %c0_i32 = arith.constant 0 : i32
    %0 = arith.cmpi eq, %arg2, %c0_i32 : i32
    %1 = arith.extui %0 : i1 to i32
    %c0_i32_0 = arith.constant 0 : i32
    %2 = arith.cmpi ne, %1, %c0_i32_0 : i32
    scf.if %2 {
      %cst_10 = arith.constant 0.000000e+00 : f32
      %12 = vector.broadcast %cst_10 : f32 to vector<64x128xf32>
      %c0_11 = arith.constant 0 : index
      %c0_12 = arith.constant 0 : index
      %13 = vector.load %arg8[%c0_11, %c0_12] : memref<64x128xf32, #tpu.memory_space<vmem>>, vector<64x128xf32>
      tpu.vector_store %arg8[%c0_11, %c0_12], %12 {strides = array<i32>} : memref<64x128xf32, #tpu.memory_space<vmem>>, vector<64x128xf32>,
    } else {
    }
    %c0 = arith.constant 0 : index
    %c0_1 = arith.constant 0 : index
    %3 = vector.load %arg8[%c0, %c0_1] : memref<64x128xf32, #tpu.memory_space<vmem>>, vector<64x128xf32>
    %c0_2 = arith.constant 0 : index
    %c0_3 = arith.constant 0 : index
    %4 = vector.load %arg3[%c0_2, %c0_3] : memref<64x256xbf16, #tpu.memory_space<vmem>>, vector<64x256xbf16>
    %c0_4 = arith.constant 0 : index
    %c0_5 = arith.constant 0 : index
    %5 = vector.load %arg4[%c0_4, %c0_5] : memref<256x128xbf16, #tpu.memory_space<vmem>>, vector<256x128xbf16>
    %cst = arith.constant dense<0.000000e+00> : vector<64x128xf32>
    %6 = tpu.matmul %4, %5, %cst {dimension_numbers = #tpu.dot_dimension_numbers<[1], [0], [0], [1], [0, 0, 1, 1], [], []>} : vector<64x256xbf16>, vector<256x128xbf16>, vector<64x128xf32> -> vector<64x128xf32>
    %7 = arith.addf %3, %6 : vector<64x128xf32>
    %c0_6 = arith.constant 0 : index
    %c0_7 = arith.constant 0 : index
    %8 = vector.load %arg8[%c0_6, %c0_7] : memref<64x128xf32, #tpu.memory_space<vmem>>, vector<64x128xf32>
    tpu.vector_store %arg8[%c0_6, %c0_7], %7 {strides = array<i32>} : memref<64x128xf32, #tpu.memory_space<vmem>>, vector<64x128xf32>,
    %c0_i32_8 = arith.constant 0 : i32
    %9 = arith.cmpi eq, %arg2, %c0_i32_8 : i32
    %10 = arith.extui %9 : i1 to i32
    %c0_i32_9 = arith.constant 0 : i32
    %11 = arith.cmpi ne, %10, %c0_i32_9 : i32
    scf.if %11 {
      %c0_10 = arith.constant 0 : index
      %c0_11 = arith.constant 0 : index
      %12 = vector.load %arg8[%c0_10, %c0_11] : memref<64x128xf32, #tpu.memory_space<vmem>>, vector<64x128xf32>
      %13 = arith.truncf %12 : vector<64x128xf32> to vector<64x128xbf16>
      %c0_12 = arith.constant 0 : index
      %c0_13 = arith.constant 0 : index
      %14 = vector.load %arg5[%c0_12, %c0_13] : memref<64x128xbf16, #tpu.memory_space<vmem>>, vector<64x128xbf16>
      tpu.vector_store %arg5[%c0_12, %c0_13], %13 {strides = array<i32>} : memref<64x128xbf16, #tpu.memory_space<vmem>>, vector<64x128xbf16>,
      %cst_14 = arith.constant dense<0.000000e+00> : vector<128xf32>
      %15 = vector.multi_reduction <add>, %12, %cst_14 [0] : vector<64x128xf32> to vector<128xf32>
      %16 = vector.shape_cast %15 : vector<128xf32> to vector<1x128xf32>
      %17 = arith.mulf %12, %12 : vector<64x128xf32>
      %cst_15 = arith.constant dense<0.000000e+00> : vector<128xf32>
      %18 = vector.multi_reduction <add>, %17, %cst_15 [0] : vector<64x128xf32> to vector<128xf32>
      %19 = vector.shape_cast %18 : vector<128xf32> to vector<1x128xf32>
      %20 = vector.shape_cast %16 : vector<1x128xf32> to vector<1x128xf32>
      %21 = vector.broadcast %20 : vector<1x128xf32> to vector<8x128xf32>
      %c0_16 = arith.constant 0 : index
      %c0_17 = arith.constant 0 : index
      %22 = vector.load %arg6[%c0_16, %c0_17] : memref<8x128xf32, #tpu.memory_space<vmem>>, vector<8x128xf32>
      tpu.vector_store %arg6[%c0_16, %c0_17], %21 {strides = array<i32>} : memref<8x128xf32, #tpu.memory_space<vmem>>, vector<8x128xf32>,
      %23 = vector.shape_cast %19 : vector<1x128xf32> to vector<1x128xf32>
      %24 = vector.broadcast %23 : vector<1x128xf32> to vector<8x128xf32>
      %c0_18 = arith.constant 0 : index
      %c0_19 = arith.constant 0 : index
      %25 = vector.load %arg7[%c0_18, %c0_19] : memref<8x128xf32, #tpu.memory_space<vmem>>, vector<8x128xf32>
      tpu.vector_store %arg7[%c0_18, %c0_19], %24 {strides = array<i32>} : memref<8x128xf32, #tpu.memory_space<vmem>>, vector<8x128xf32>,
    } else {
    }
    return
  }
  func.func @transform_0(%arg0: i32, %arg1: i32, %arg2: i32) -> (i32, i32) {
    %c0_i32 = arith.constant 0 : i32
    return %arg0, %arg2 : i32, i32
  }
  func.func @transform_1(%arg0: i32, %arg1: i32, %arg2: i32) -> (i32, i32) {
    %c0_i32 = arith.constant 0 : i32
    return %arg2, %arg1 : i32, i32
  }
  func.func @transform_2(%arg0: i32, %arg1: i32, %arg2: i32) -> (i32, i32) {
    %c0_i32 = arith.constant 0 : i32
    return %arg0, %arg1 : i32, i32
  }
  func.func @transform_3(%arg0: i32, %arg1: i32, %arg2: i32) -> (i32, i32) {
    %c0_i32 = arith.constant 0 : i32
    return %arg0, %arg1 : i32, i32
  }
  func.func @transform_4(%arg0: i32, %arg1: i32, %arg2: i32) -> (i32, i32) {
    %c0_i32 = arith.constant 0 : i32
    return %arg0, %arg1 : i32, i32
  }
}

</mosaic_0001>

<llo_original>
// kernel: tpu_custom_call.1
$region0: #{tpu_custom_call.1}
  #allocation0 [shape = 'u32[]', space=smem, size = 0x4, offset = 0x4, fixed_abs, tag = 'smem constant byte address 0x4 - core index']
  #allocation1 [shape = 'u32[72,128]{1,0:T(1,128)}', space=vmem, size = 0x9000, scoped, tag = 'internal scratch']
  #allocation2 [shape = 'f32[64,128]{1,0:T(8,128)}', space=vmem, size = 0x8000, scoped, tag = 'scratch operand']
  %s0 = inlined_call_operand.hbm [shape: bf16[128,256], index: 0, kind: input, shape index: {}]
  %s1 = inlined_call_operand.hbm [shape: bf16[256,128], index: 1, kind: input, shape index: {}]
  %s2 = inlined_call_operand.hbm [shape: bf16[128,128], index: 2, kind: output, shape index: {0}]
  %s3 = inlined_call_operand.hbm [shape: f32[16,128], index: 3, kind: output, shape index: {1}]
  %s4 = inlined_call_operand.hbm [shape: f32[16,128], index: 4, kind: output, shape index: {2}]
  %5 = xla_tuple %s2, %s3, %s4
  %s6 = sld [smem:[#allocation0]]
  $region73: #{tpu_custom_call.1} parent=0
    _
  %s8 = ssub.s32 1, %s6
  %s9 = scalar_select 0, %s8, %s6
  $region1: #{tpu_custom_call.1} parent=0
    #allocation3 [shape = 'u8[65536]{0}', space=vmem, size = 0x10000, scoped, tag = 'input window, operand 0']
    #allocation4 [shape = 's32[2]{0}', space=sflag, size = 0x8, scoped, tag = 'scoped memory for tpu_custom_call.1']
    #allocation5 [shape = 's32[2]{0}', space=sflag, size = 0x8, scoped, tag = 'scoped memory for tpu_custom_call.1']
    #allocation6 [shape = 'u8[65536]{0}', space=vmem, size = 0x10000, scoped, tag = 'input window, operand 1, single buffered']
    #allocation7 [shape = 's32[1]{0}', space=sflag, size = 0x4, scoped, tag = 'scoped memory for tpu_custom_call.1']
    #allocation8 [shape = 'u8[32768]{0}', space=vmem, size = 0x8000, scoped, tag = 'output window, operand 0']
    #allocation9 [shape = 'u8[8192]{0}', space=vmem, size = 0x2000, scoped, tag = 'output window, operand 1']
    #allocation10 [shape = 's32[2]{0}', space=sflag, size = 0x8, scoped, tag = 'scoped memory for tpu_custom_call.1']
    #allocation11 [shape = 'u8[8192]{0}', space=vmem, size = 0x2000, scoped, tag = 'output window, operand 2']
    %10 = vsyncpa [#allocation4], 0
    %s11 = scalar_lea.sflag [#allocation4], 1
    %12 = vsyncpa %s11, 0
    %13 = vsyncpa [#allocation7], 0
    %14 = vsyncpa [#allocation5], 0
    %s15 = scalar_lea.sflag [#allocation5], 1
    %16 = vsyncpa %s15, 0
    %17 = vsyncpa [#allocation10], 0
    %s18 = scalar_lea.sflag [#allocation10], 1
    %19 = vsyncpa %s18, 0
    loop: start=0, step=1, limit=4
    $region2: #{tpu_custom_call.1} parent=1 // loop_pre_header
      _
    $region3: #{tpu_custom_call.1} parent=1 // loop_header
      %s21 = sphi 0, %s25
      %p22 = scmp.ge.s32.totalorder %s21, 4
      %s28 = sphi 0, %s47
      %s29 = sphi 0, %s43
      %s30 = sphi 0, %s39
      %s31 = sphi 0, %s28
      %s32 = sphi 0, %s29
      %s33 = sphi 0, %s30
      %s34 = sphi 0, %s31
      %s35 = sphi 0, %s32
      %s36 = sphi 0, %s33
      %s52 = sphi 0, %s54
      %s55 = sphi 0, %s52
      %s56 = sphi 0, %s55
      %s72 = sphi 0, %s56
      %s80 = sphi 0, %s82
      %s83 = sphi 0, %s80
      %s84 = sphi 0, %s83
      %s100 = sphi 0, %s84
      %s108 = sphi 0, %s110
      %s111 = sphi 0, %s108
      %s112 = sphi 0, %s111
      %s128 = sphi 0, %s112
      %s136 = sphi 0, %s138
      %s139 = sphi 0, %s136
      %s140 = sphi 0, %s139
      %s156 = sphi 0, %s140
      %s164 = sphi 0, %s166
      %s167 = sphi 0, %s164
      %s168 = sphi 0, %s167
      %s184 = sphi 0, %s168
    $region4: #{tpu_custom_call.1} parent=1 // loop_header_branch
      %24 = sbr.rel (%p22) target = $region8
    $region5: #{tpu_custom_call.1} parent=1 // loop_body
      %s26 = ssub.s32 %s21, 1
      %s27 = ssub.s32 %s21, 2
      %s37 = sadd.s32 1, %s30
      %p38 = scmp.ge.s32.totalorder %s37, 1
      %s39 = scalar_select %p38, 0, %s37
      %s40 = sadd.s32 1, %s29
      %s41 = scalar_select %p38, %s40, %s29
      %p42 = scmp.ge.s32.totalorder %s41, 1
      %s43 = scalar_select %p42, 0, %s41
      %s44 = sadd.s32 1, %s28
      %s45 = scalar_select %p42, %s44, %s28
      %p46 = scmp.ge.s32.totalorder %s45, 2
      %s47 = scalar_select %p46, 0, %s45
      %s48 = ssub.s32 %s28, %s47
      %s49 = ssub.s32 %s30, %s39
      %s50 = sor.u32 %s48, %s49
      %p51 = scmp.eq.s32.totalorder %s50, 0
      %s53 = sadd.s32 %s52, 1
      %s54 = scalar_select %p51, %s52, %s53
      %p57 = pneg %p51
      %p58 = scmp.eq.s32.totalorder %s21, 1
      %p59 = por %p57, %p58
      %p60 = scmp.ne.s32.totalorder %s52, %s55
      %p61 = scmp.eq.s32.totalorder %s21, 0
      %p62 = por %p60, %p61
      %p63 = scmp.ne.s32.totalorder %s52, %s55
      %p64 = scmp.eq.s32.totalorder %s26, 1
      %p65 = por %p63, %p64
      %p66 = scmp.ne.s32.totalorder %s55, %s56
      %p67 = scmp.eq.s32.totalorder %s26, 0
      %p68 = por %p66, %p67
      %p69 = scmp.ne.s32.totalorder %s55, %s56
      %p70 = scmp.eq.s32.totalorder %s27, 1
      %p71 = por %p69, %p70
      %p73 = scmp.ne.s32.totalorder %s56, %s72
      %p74 = scmp.eq.s32.totalorder %s27, 0
      %p75 = por %p73, %p74
      %s76 = ssub.s32 %s30, %s39
      %s77 = ssub.s32 %s29, %s43
      %s78 = sor.u32 %s76, %s77
      %p79 = scmp.eq.s32.totalorder %s78, 0
      %s81 = sadd.s32 %s80, 1
      %s82 = scalar_select %p79, %s80, %s81
      %p85 = pneg %p79
      %p86 = scmp.eq.s32.totalorder %s21, 1
      %p87 = por %p85, %p86
      %p88 = scmp.ne.s32.totalorder %s80, %s83
      %p89 = scmp.eq.s32.totalorder %s21, 0
      %p90 = por %p88, %p89
      %p91 = scmp.ne.s32.totalorder %s80, %s83
      %p92 = scmp.eq.s32.totalorder %s26, 1
      %p93 = por %p91, %p92
      %p94 = scmp.ne.s32.totalorder %s83, %s84
      %p95 = scmp.eq.s32.totalorder %s26, 0
      %p96 = por %p94, %p95
      %p97 = scmp.ne.s32.totalorder %s83, %s84
      %p98 = scmp.eq.s32.totalorder %s27, 1
      %p99 = por %p97, %p98
      %p101 = scmp.ne.s32.totalorder %s84, %s100
      %p102 = scmp.eq.s32.totalorder %s27, 0
      %p103 = por %p101, %p102
      %s104 = ssub.s32 %s28, %s47
      %s105 = ssub.s32 %s29, %s43
      %s106 = sor.u32 %s104, %s105
      %p107 = scmp.eq.s32.totalorder %s106, 0
      %s109 = sadd.s32 %s108, 1
      %s110 = scalar_select %p107, %s108, %s109
      %p113 = pneg %p107
      %p114 = scmp.eq.s32.totalorder %s21, 1
      %p115 = por %p113, %p114
      %p116 = scmp.ne.s32.totalorder %s108, %s111
      %p117 = scmp.eq.s32.totalorder %s21, 0
      %p118 = por %p116, %p117
      %p119 = scmp.ne.s32.totalorder %s108, %s111
      %p120 = scmp.eq.s32.totalorder %s26, 1
      %p121 = por %p119, %p120
      %p122 = scmp.ne.s32.totalorder %s111, %s112
      %p123 = scmp.eq.s32.totalorder %s26, 0
      %p124 = por %p122, %p123
      %p125 = scmp.ne.s32.totalorder %s111, %s112
      %p126 = scmp.eq.s32.totalorder %s27, 1
      %p127 = por %p125, %p126
      %p129 = scmp.ne.s32.totalorder %s112, %s128
      %p130 = scmp.eq.s32.totalorder %s27, 0
      %p131 = por %p129, %p130
      %s132 = ssub.s32 %s28, %s47
      %s133 = ssub.s32 %s29, %s43
      %s134 = sor.u32 %s132, %s133
      %p135 = scmp.eq.s32.totalorder %s134, 0
      %s137 = sadd.s32 %s136, 1
      %s138 = scalar_select %p135, %s136, %s137
      %p141 = pneg %p135
      %p142 = scmp.eq.s32.totalorder %s21, 1
      %p143 = por %p141, %p142
      %p144 = scmp.ne.s32.totalorder %s136, %s139
      %p145 = scmp.eq.s32.totalorder %s21, 0
      %p146 = por %p144, %p145
      %p147 = scmp.ne.s32.totalorder %s136, %s139
      %p148 = scmp.eq.s32.totalorder %s26, 1
      %p149 = por %p147, %p148
      %p150 = scmp.ne.s32.totalorder %s139, %s140
      %p151 = scmp.eq.s32.totalorder %s26, 0
      %p152 = por %p150, %p151
      %p153 = scmp.ne.s32.totalorder %s139, %s140
      %p154 = scmp.eq.s32.totalorder %s27, 1
      %p155 = por %p153, %p154
      %p157 = scmp.ne.s32.totalorder %s140, %s156
      %p158 = scmp.eq.s32.totalorder %s27, 0
      %p159 = por %p157, %p158
      %s160 = ssub.s32 %s28, %s47
      %s161 = ssub.s32 %s29, %s43
      %s162 = sor.u32 %s160, %s161
      %p163 = scmp.eq.s32.totalorder %s162, 0
      %s165 = sadd.s32 %s164, 1
      %s166 = scalar_select %p163, %s164, %s165
      %p169 = pneg %p163
      %p170 = scmp.eq.s32.totalorder %s21, 1
      %p171 = por %p169, %p170
      %p172 = scmp.ne.s32.totalorder %s164, %s167
      %p173 = scmp.eq.s32.totalorder %s21, 0
      %p174 = por %p172, %p173
      %p175 = scmp.ne.s32.totalorder %s164, %s167
      %p176 = scmp.eq.s32.totalorder %s26, 1
      %p177 = por %p175, %p176
      %p178 = scmp.ne.s32.totalorder %s167, %s168
      %p179 = scmp.eq.s32.totalorder %s26, 0
      %p180 = por %p178, %p179
      %p181 = scmp.ne.s32.totalorder %s167, %s168
      %p182 = scmp.eq.s32.totalorder %s27, 1
      %p183 = por %p181, %p182
      %p185 = scmp.ne.s32.totalorder %s168, %s184
      %p186 = scmp.eq.s32.totalorder %s27, 0
      %p187 = por %p185, %p186
      %p188 = scmp.le.s32.totalorder 1, %s21
      %p189 = scmp.lt.s32.totalorder %s21, 3
      %p190 = pnand %p188, %p189
      %p191 = pneg %p190
      // Predicated region
      $region9: #{tpu_custom_call.1} parent=5 // pred_check
        _
      $region10: #{tpu_custom_call.1} parent=5 // pred_check_branch
        %193 = sbr.rel (%p190) target = $region12
      $region11: #{tpu_custom_call.1} parent=5 // pred_region
        %s194 = ssub.s32 %s21, 1
        // Predicated region
        $region13: #{tpu_custom_call.1} parent=11 // pred_check
          %p195 = pneg %p96
        $region14: #{tpu_custom_call.1} parent=11 // pred_check_branch
          %197 = sbr.rel (%p195) target = $region16
        $region15: #{tpu_custom_call.1} parent=11 // pred_region
          %s198 = smul.u32 32, %s33
          %200 = vsyncadd [#allocation7], 0
          %s201 = sadd.s32 %s32, %s198
          %s202 = smul.addr %s201, 4
          %s203 = scalar_lea.hbm %s1, %s202
          %s204 = sshll.u32 %s203, 4
          %s205 = int_to_ptr.hbm [resolvable:$true] %s204
          %s206 = sshll.u32 [#allocation6], 4
          %s207 = int_to_ptr.vmem [resolvable:$true] %s206
          %212 = dma.hbm_to_vmem [thread:$0]  %s205, 2048, %s207, [#allocation7], 64, 64, 4
        $region16: #{tpu_custom_call.1} parent=11 // pred_fallthru
          _
      $region12: #{tpu_custom_call.1} parent=5 // pred_fallthru
        _
      %p213 = scmp.lt.s32.totalorder %s21, 2
      // Predicated region
      $region17: #{tpu_custom_call.1} parent=5 // pred_check
        %p214 = pneg %p213
      $region18: #{tpu_custom_call.1} parent=5 // pred_check_branch
        %216 = sbr.rel (%p214) target = $region20
      $region19: #{tpu_custom_call.1} parent=5 // pred_region
        // Predicated region
        $region21: #{tpu_custom_call.1} parent=19 // pred_check
          %p217 = pneg %p62
        $region22: #{tpu_custom_call.1} parent=19 // pred_check_branch
          %219 = sbr.rel (%p217) target = $region24
        $region23: #{tpu_custom_call.1} parent=19 // pred_region
          %s220 = sand.u32 %s52, 1
          %s221 = scalar_lea.sflag [#allocation4], %s220
          %s222 = sand.u32 %s52, 1
          %s223 = smul.addr %s222, 64
          %s224 = scalar_lea.vmem [#allocation3], %s223
          %s225 = smul.u32 8, %s28
          %s226 = smul.u32 2, %s30
          %228 = vsyncadd %s221, 0
          %s229 = smul.addr %s225, 2
          %s230 = sadd.s32 %s226, %s229
          %s231 = smul.addr %s230, 4
          %s232 = scalar_lea.hbm %s0, %s231
          %s233 = sshll.u32 %s232, 4
          %s234 = int_to_ptr.hbm [resolvable:$true] %s233
          %s235 = sshll.u32 %s224, 4
          %s236 = int_to_ptr.vmem [resolvable:$true] %s235
          %241 = dma.hbm_to_vmem [thread:$0]  %s234, 1024, %s236, %s221, 128, 128, 8
        $region24: #{tpu_custom_call.1} parent=19 // pred_fallthru
          _
      $region20: #{tpu_custom_call.1} parent=5 // pred_fallthru
        _
      %p242 = scmp.le.s32.totalorder 1, %s21
      %p243 = scmp.lt.s32.totalorder %s21, 3
      %p244 = pnand %p242, %p243
      %p245 = pneg %p244
      // Predicated region
      $region25: #{tpu_custom_call.1} parent=5 // pred_check
        _
      $region26: #{tpu_custom_call.1} parent=5 // pred_check_branch
        %247 = sbr.rel (%p244) target = $region28
      $region27: #{tpu_custom_call.1} parent=5 // pred_region
        %s248 = ssub.s32 %s21, 1
        %s249 = sand.u32 %s55, 1
        %s250 = scalar_lea.sflag [#allocation4], %s249
        %s251 = sand.u32 %s55, 1
        %s252 = smul.addr %s251, 64
        %s253 = scalar_lea.vmem [#allocation3], %s252
        // Predicated region
        $region29: #{tpu_custom_call.1} parent=27 // pred_check
          %p254 = pneg %p68
        $region30: #{tpu_custom_call.1} parent=27 // pred_check_branch
          %256 = sbr.rel (%p254) target = $region32
        $region31: #{tpu_custom_call.1} parent=27 // pred_region
          %258 = dma.done %s250, 1024
        $region32: #{tpu_custom_call.1} parent=27 // pred_fallthru
          _
        // Predicated region
        $region33: #{tpu_custom_call.1} parent=27 // pred_check
          %p259 = pneg %p96
        $region34: #{tpu_custom_call.1} parent=27 // pred_check_branch
          %261 = sbr.rel (%p259) target = $region36
        $region35: #{tpu_custom_call.1} parent=27 // pred_region
          %263 = dma.done [#allocation7], 2048
        $region36: #{tpu_custom_call.1} parent=27 // pred_fallthru
          _
        %s264 = sand.u32 %s55, 1
        %s265 = scalar_lea.sflag [#allocation4], %s264
        %s266 = sand.u32 %s55, 1
        %s267 = smul.addr %s266, 64
        %s268 = scalar_lea.vmem [#allocation3], %s267
        %p269 = pneg %p68
        %p270 = pneg %p65
        %p271 = pneg %p96
        %p272 = pneg %p93
        %p273 = pneg %p124
        %p274 = pneg %p121
        %s275 = sand.u32 %s111, 1
        %s276 = scalar_lea.sflag [#allocation5], %s275
        %s277 = sand.u32 %s111, 1
        %s278 = smul.addr %s277, 32
        %s279 = scalar_lea.vmem [#allocation8], %s278
        %p280 = pneg %p152
        %p281 = pneg %p149
        %s282 = sand.u32 %s26, 1
        %s283 = scalar_lea.sflag [#allocation10], %s282
        %s284 = sand.u32 %s139, 1
        %s285 = smul.addr %s284, 8
        %s286 = scalar_lea.vmem [#allocation9], %s285
        %p287 = pneg %p180
        %p288 = pneg %p177
        %s289 = sand.u32 %s26, 1
        %s290 = scalar_lea.sflag [#allocation10], %s289
        %s291 = sand.u32 %s167, 1
        %s292 = smul.addr %s291, 8
        %s293 = scalar_lea.vmem [#allocation11], %s292
        %s294 = smul.u32 8, %s31
        %s295 = smul.u32 2, %s33
        %s296 = smul.u32 32, %s33
        %s297 = smul.u32 8, %s31
        %p298 = scmp.eq.s32.totalorder %s33, 0
        // Predicated region
        $region37: #{tpu_custom_call.1} parent=27 // pred_check
          %p299 = pneg %p298
        $region38: #{tpu_custom_call.1} parent=27 // pred_check_branch
          %301 = sbr.rel (%p299) target = $region40
        $region39: #{tpu_custom_call.1} parent=27 // pred_region
          %302 = vst [vmem:[#allocation2] sm:$0xff] 0.0
          %303 = vst [vmem:[#allocation2 + $0x8] sm:$0xff] 0.0
          %304 = vst [vmem:[#allocation2 + $0x10] sm:$0xff] 0.0
          %305 = vst [vmem:[#allocation2 + $0x18] sm:$0xff] 0.0
          %306 = vst [vmem:[#allocation2 + $0x20] sm:$0xff] 0.0
          %307 = vst [vmem:[#allocation2 + $0x28] sm:$0xff] 0.0
          %308 = vst [vmem:[#allocation2 + $0x30] sm:$0xff] 0.0
          %309 = vst [vmem:[#allocation2 + $0x38] sm:$0xff] 0.0
        $region40: #{tpu_custom_call.1} parent=27 // pred_fallthru
          _
        %v310 = vld [vmem:[#allocation2] sm:$0xff]
        %v311 = vld [vmem:[#allocation2 + $0x8] sm:$0xff]
        %v312 = vld [vmem:[#allocation2 + $0x10] sm:$0xff]
        %v313 = vld [vmem:[#allocation2 + $0x18] sm:$0xff]
        %v314 = vld [vmem:[#allocation2 + $0x20] sm:$0xff]
        %v315 = vld [vmem:[#allocation2 + $0x28] sm:$0xff]
        %v316 = vld [vmem:[#allocation2 + $0x30] sm:$0xff]
        %v317 = vld [vmem:[#allocation2 + $0x38] sm:$0xff]
        %v318 = vld [vmem:[%s253] sm:$0xff]
        %v319 = vld [vmem:[%s253 + $0x8] sm:$0xff]
        %v320 = vld [vmem:[%s253 + $0x10] sm:$0xff]
        %v321 = vld [vmem:[%s253 + $0x18] sm:$0xff]
        %v322 = vld [vmem:[%s253 + $0x20] sm:$0xff]
        %v323 = vld [vmem:[%s253 + $0x28] sm:$0xff]
        %v324 = vld [vmem:[%s253 + $0x30] sm:$0xff]
        %v325 = vld [vmem:[%s253 + $0x38] sm:$0xff]
        %v326 = vld [vmem:[#allocation6] sm:$0xf]
        %v327 = vld [vmem:[#allocation6 + $0x4] sm:$0xf]
        %v328 = vld [vmem:[#allocation6 + $0x8] sm:$0xf]
        %v329 = vld [vmem:[#allocation6 + $0xc] sm:$0xf]
        %v330 = vld [vmem:[#allocation6 + $0x10] sm:$0xf]
        %v331 = vld [vmem:[#allocation6 + $0x14] sm:$0xf]
        %v332 = vld [vmem:[#allocation6 + $0x18] sm:$0xf]
        %v333 = vld [vmem:[#allocation6 + $0x1c] sm:$0xf]
        %v334 = vld [vmem:[#allocation6 + $0x20] sm:$0xf]
        %v335 = vld [vmem:[#allocation6 + $0x24] sm:$0xf]
        %v336 = vld [vmem:[#allocation6 + $0x28] sm:$0xf]
        %v337 = vld [vmem:[#allocation6 + $0x2c] sm:$0xf]
        %v338 = vld [vmem:[#allocation6 + $0x30] sm:$0xf]
        %v339 = vld [vmem:[#allocation6 + $0x34] sm:$0xf]
        %v340 = vld [vmem:[#allocation6 + $0x38] sm:$0xf]
        %v341 = vld [vmem:[#allocation6 + $0x3c] sm:$0xf]
        %v342 = vld [vmem:[#allocation6 + $0x40] sm:$0xf]
        %v343 = vld [vmem:[#allocation6 + $0x44] sm:$0xf]
        %v344 = vld [vmem:[#allocation6 + $0x48] sm:$0xf]
        %v345 = vld [vmem:[#allocation6 + $0x4c] sm:$0xf]
        %v346 = vld [vmem:[#allocation6 + $0x50] sm:$0xf]
        %v347 = vld [vmem:[#allocation6 + $0x54] sm:$0xf]
        %v348 = vld [vmem:[#allocation6 + $0x58] sm:$0xf]
        %v349 = vld [vmem:[#allocation6 + $0x5c] sm:$0xf]
        %v350 = vld [vmem:[#allocation6 + $0x60] sm:$0xf]
        %v351 = vld [vmem:[#allocation6 + $0x64] sm:$0xf]
        %v352 = vld [vmem:[#allocation6 + $0x68] sm:$0xf]
        %v353 = vld [vmem:[#allocation6 + $0x6c] sm:$0xf]
        %v354 = vld [vmem:[#allocation6 + $0x70] sm:$0xf]
        %v355 = vld [vmem:[#allocation6 + $0x74] sm:$0xf]
        %v356 = vld [vmem:[#allocation6 + $0x78] sm:$0xf]
        %v357 = vld [vmem:[#allocation6 + $0x7c] sm:$0xf]
        %v366 = vunpack.c.l.b16 %v318
        %v367 = vunpack.c.h.b16 %v318
        %v368 = vunpack.c.l.b16 %v319
        %v369 = vunpack.c.h.b16 %v319
        %v370 = vunpack.c.l.b16 %v320
        %v371 = vunpack.c.h.b16 %v320
        %v372 = vunpack.c.l.b16 %v321
        %v373 = vunpack.c.h.b16 %v321
        %v374 = vunpack.c.l.b16 %v322
        %v375 = vunpack.c.h.b16 %v322
        %v376 = vunpack.c.l.b16 %v323
        %v377 = vunpack.c.h.b16 %v323
        %v378 = vunpack.c.l.b16 %v324
        %v379 = vunpack.c.h.b16 %v324
        %v380 = vunpack.c.l.b16 %v325
        %v381 = vunpack.c.h.b16 %v325
        %v382 = vpack.c.b16 %v368, %v366
        %v383 = vpack.c.b16 %v369, %v367
        %v384 = vpack.c.b16 %v372, %v370
        %v385 = vpack.c.b16 %v373, %v371
        %v386 = vpack.c.b16 %v376, %v374
        %v387 = vpack.c.b16 %v377, %v375
        %v388 = vpack.c.b16 %v380, %v378
        %v389 = vpack.c.b16 %v381, %v379
        %v430 = vunpack.c.l.b16 %v326
        %v431 = vunpack.c.l.b16 %v327
        %v432 = vunpack.c.l.b16 %v328
        %v433 = vunpack.c.l.b16 %v329
        %v434 = vunpack.c.l.b16 %v330
        %v435 = vunpack.c.l.b16 %v331
        %v436 = vunpack.c.l.b16 %v332
        %v437 = vunpack.c.l.b16 %v333
        %v438 = vunpack.c.l.b16 %v334
        %v439 = vunpack.c.l.b16 %v335
        %v440 = vunpack.c.l.b16 %v336
        %v441 = vunpack.c.l.b16 %v337
        %v442 = vunpack.c.l.b16 %v338
        %v443 = vunpack.c.l.b16 %v339
        %v444 = vunpack.c.l.b16 %v340
        %v445 = vunpack.c.l.b16 %v341
        %v446 = vunpack.c.l.b16 %v342
        %v447 = vunpack.c.l.b16 %v343
        %v448 = vunpack.c.l.b16 %v344
        %v449 = vunpack.c.l.b16 %v345
        %v450 = vunpack.c.l.b16 %v346
        %v451 = vunpack.c.l.b16 %v347
        %v452 = vunpack.c.l.b16 %v348
        %v453 = vunpack.c.l.b16 %v349
        %v454 = vunpack.c.l.b16 %v350
        %v455 = vunpack.c.l.b16 %v351
        %v456 = vunpack.c.l.b16 %v352
        %v457 = vunpack.c.l.b16 %v353
        %v458 = vunpack.c.l.b16 %v354
        %v459 = vunpack.c.l.b16 %v355
        %v460 = vunpack.c.l.b16 %v356
        %v461 = vunpack.c.l.b16 %v357
        %v462 = vpack.c.b16 %v431, %v430
        %v463 = vpack.c.b16 %v433, %v432
        %v464 = vpack.c.b16 %v435, %v434
        %v465 = vpack.c.b16 %v437, %v436
        %v466 = vpack.c.b16 %v439, %v438
        %v467 = vpack.c.b16 %v441, %v440
        %v468 = vpack.c.b16 %v443, %v442
        %v469 = vpack.c.b16 %v445, %v444
        %v470 = vpack.c.b16 %v447, %v446
        %v471 = vpack.c.b16 %v449, %v448
        %v472 = vpack.c.b16 %v451, %v450
        %v473 = vpack.c.b16 %v453, %v452
        %v474 = vpack.c.b16 %v455, %v454
        %v475 = vpack.c.b16 %v457, %v456
        %v476 = vpack.c.b16 %v459, %v458
        %v477 = vpack.c.b16 %v461, %v460
        %494 = vmatpush.bf16.msra.mxu0 %v469
        %495 = vmatpush.bf16.msra.mxu0 %v468
        %496 = vmatpush.bf16.msra.mxu0 %v467
        %497 = vmatpush.bf16.msra.mxu0 %v466
        %498 = vmatpush.bf16.msra.mxu0 %v465
        %499 = vmatpush.bf16.msra.mxu0 %v464
        %500 = vmatpush.bf16.msra.mxu0 %v463
        %501 = vmatpush.bf16.msra.mxu0 %v462
        %502 = vmatmul.bf16.gmra.mxu0 %v382
        %v503 = vpop.f32.mrf.mxu0
        %v504 = vadd.f32 0.0, %v503
        %v505 = vpop.f32.mrf.mxu0
        %v506 = vadd.f32 0.0, %v505
        %507 = vmatmul.bf16.gmra.mxu0 %v384
        %v508 = vpop.f32.mrf.mxu0
        %v509 = vadd.f32 0.0, %v508
        %v510 = vpop.f32.mrf.mxu0
        %v511 = vadd.f32 0.0, %v510
        %512 = vmatmul.bf16.gmra.mxu0 %v386
        %v513 = vpop.f32.mrf.mxu0
        %v514 = vadd.f32 0.0, %v513
        %v515 = vpop.f32.mrf.mxu0
        %v516 = vadd.f32 0.0, %v515
        %517 = vmatmul.bf16.gmra.mxu0 %v388
        %v518 = vpop.f32.mrf.mxu0
        %v519 = vadd.f32 0.0, %v518
        %v520 = vpop.f32.mrf.mxu0
        %v521 = vadd.f32 0.0, %v520
        %522 = vdwg.mxu0
        %523 = vmatpush.bf16.msra.mxu0 %v477
        %524 = vmatpush.bf16.msra.mxu0 %v476
        %525 = vmatpush.bf16.msra.mxu0 %v475
        %526 = vmatpush.bf16.msra.mxu0 %v474
        %527 = vmatpush.bf16.msra.mxu0 %v473
        %528 = vmatpush.bf16.msra.mxu0 %v472
        %529 = vmatpush.bf16.msra.mxu0 %v471
        %530 = vmatpush.bf16.msra.mxu0 %v470
        %531 = vmatmul.bf16.gmra.mxu0 %v383
        %v532 = vpop.f32.mrf.mxu0
        %v533 = vadd.f32 %v504, %v532
        %v534 = vpop.f32.mrf.mxu0
        %v535 = vadd.f32 %v506, %v534
        %536 = vmatmul.bf16.gmra.mxu0 %v385
        %v537 = vpop.f32.mrf.mxu0
        %v538 = vadd.f32 %v509, %v537
        %v539 = vpop.f32.mrf.mxu0
        %v540 = vadd.f32 %v511, %v539
        %541 = vmatmul.bf16.gmra.mxu0 %v387
        %v542 = vpop.f32.mrf.mxu0
        %v543 = vadd.f32 %v514, %v542
        %v544 = vpop.f32.mrf.mxu0
        %v545 = vadd.f32 %v516, %v544
        %546 = vmatmul.bf16.gmra.mxu0 %v389
        %v547 = vpop.f32.mrf.mxu0
        %v548 = vadd.f32 %v519, %v547
        %v549 = vpop.f32.mrf.mxu0
        %v550 = vadd.f32 %v521, %v549
        %551 = vdwg.mxu0
        %v552 = vadd.f32 %v310, %v533
        %v553 = vadd.f32 %v311, %v535
        %v554 = vadd.f32 %v312, %v538
        %v555 = vadd.f32 %v313, %v540
        %v556 = vadd.f32 %v314, %v543
        %v557 = vadd.f32 %v315, %v545
        %v558 = vadd.f32 %v316, %v548
        %v559 = vadd.f32 %v317, %v550
        %560 = vst [vmem:[#allocation2] sm:$0xff] %v552
        %561 = vst [vmem:[#allocation2 + $0x8] sm:$0xff] %v553
        %562 = vst [vmem:[#allocation2 + $0x10] sm:$0xff] %v554
        %563 = vst [vmem:[#allocation2 + $0x18] sm:$0xff] %v555
        %564 = vst [vmem:[#allocation2 + $0x20] sm:$0xff] %v556
        %565 = vst [vmem:[#allocation2 + $0x28] sm:$0xff] %v557
        %566 = vst [vmem:[#allocation2 + $0x30] sm:$0xff] %v558
        %567 = vst [vmem:[#allocation2 + $0x38] sm:$0xff] %v559
        // Predicated region
        $region41: #{tpu_custom_call.1} parent=27 // pred_check
          %p568 = pneg %p298
        $region42: #{tpu_custom_call.1} parent=27 // pred_check_branch
          %570 = sbr.rel (%p568) target = $region44
        $region43: #{tpu_custom_call.1} parent=27 // pred_region
          %v571 = vld [vmem:[#allocation2] sm:$0xff]
          %v572 = vld [vmem:[#allocation2 + $0x8] sm:$0xff]
          %v573 = vld [vmem:[#allocation2 + $0x10] sm:$0xff]
          %v574 = vld [vmem:[#allocation2 + $0x18] sm:$0xff]
          %v575 = vld [vmem:[#allocation2 + $0x20] sm:$0xff]
          %v576 = vld [vmem:[#allocation2 + $0x28] sm:$0xff]
          %v577 = vld [vmem:[#allocation2 + $0x30] sm:$0xff]
          %v578 = vld [vmem:[#allocation2 + $0x38] sm:$0xff]
          %v579 = vpack.c.bf16 %v571, %v571
          %v580 = vpack.c.bf16 %v572, %v572
          %v581 = vpack.c.bf16 %v573, %v573
          %v582 = vpack.c.bf16 %v574, %v574
          %v583 = vpack.c.bf16 %v575, %v575
          %v584 = vpack.c.bf16 %v576, %v576
          %v585 = vpack.c.bf16 %v577, %v577
          %v586 = vpack.c.bf16 %v578, %v578
          %587 = vst [vmem:[%s279] sm:$0xf] %v579
          %588 = vst [vmem:[%s279 + $0x4] sm:$0xf] %v580
          %589 = vst [vmem:[%s279 + $0x8] sm:$0xf] %v581
          %590 = vst [vmem:[%s279 + $0xc] sm:$0xf] %v582
          %591 = vst [vmem:[%s279 + $0x10] sm:$0xf] %v583
          %592 = vst [vmem:[%s279 + $0x14] sm:$0xf] %v584
          %593 = vst [vmem:[%s279 + $0x18] sm:$0xf] %v585
          %594 = vst [vmem:[%s279 + $0x1c] sm:$0xf] %v586
          %v595 = vadd.f32 %v571, %v572
          %v596 = vadd.f32 %v595, %v573
          %v597 = vadd.f32 %v596, %v574
          %v598 = vadd.f32 %v597, %v575
          %v599 = vadd.f32 %v598, %v576
          %v600 = vadd.f32 %v599, %v577
          %v601 = vadd.f32 %v600, %v578
          %v602 = vrot.slane %v601, 4
          %v603 = vadd.f32 %v601, %v602
          %v604 = vrot.slane %v603, 2
          %v605 = vadd.f32 %v603, %v604
          %v606 = vrot.slane %v605, 1
          %v607 = vadd.f32 %v605, %v606
          %v608 = vmul.f32 %v571, %v571
          %v609 = vmul.f32 %v572, %v572
          %v610 = vmul.f32 %v573, %v573
          %v611 = vmul.f32 %v574, %v574
          %v612 = vmul.f32 %v575, %v575
          %v613 = vmul.f32 %v576, %v576
          %v614 = vmul.f32 %v577, %v577
          %v615 = vmul.f32 %v578, %v578
          %v616 = vadd.f32 %v608, %v609
          %v617 = vadd.f32 %v616, %v610
          %v618 = vadd.f32 %v617, %v611
          %v619 = vadd.f32 %v618, %v612
          %v620 = vadd.f32 %v619, %v613
          %v621 = vadd.f32 %v620, %v614
          %v622 = vadd.f32 %v621, %v615
          %v623 = vrot.slane %v622, 4
          %v624 = vadd.f32 %v622, %v623
          %v625 = vrot.slane %v624, 2
          %v626 = vadd.f32 %v624, %v625
          %v627 = vrot.slane %v626, 1
          %v628 = vadd.f32 %v626, %v627
          %629 = vst [vmem:[%s286] sm:$0xff] %v607
          %630 = vst [vmem:[%s293] sm:$0xff] %v628
        $region44: #{tpu_custom_call.1} parent=27 // pred_fallthru
          _
        %s631 = sand.u32 %s111, 1
        %s632 = scalar_lea.sflag [#allocation5], %s631
        %s633 = sand.u32 %s111, 1
        %s634 = smul.addr %s633, 32
        %s635 = scalar_lea.vmem [#allocation8], %s634
        %s636 = sand.u32 %s26, 1
        %s637 = scalar_lea.sflag [#allocation10], %s636
        %s638 = sand.u32 %s139, 1
        %s639 = smul.addr %s638, 8
        %s640 = scalar_lea.vmem [#allocation9], %s639
        %s641 = sand.u32 %s26, 1
        %s642 = scalar_lea.sflag [#allocation10], %s641
        %s643 = sand.u32 %s167, 1
        %s644 = smul.addr %s643, 8
        %s645 = scalar_lea.vmem [#allocation11], %s644
        // Predicated region
        $region45: #{tpu_custom_call.1} parent=27 // pred_check
          %p646 = pneg %p121
        $region46: #{tpu_custom_call.1} parent=27 // pred_check_branch
          %648 = sbr.rel (%p646) target = $region48
        $region47: #{tpu_custom_call.1} parent=27 // pred_region
          %s649 = smul.u32 8, %s31
          %651 = vsyncadd %s632, 0
          %s652 = sadd.s32 %s32, %s649
          %s653 = smul.addr %s652, 4
          %s654 = scalar_lea.hbm %s2, %s653
          %s655 = sshll.u32 %s635, 4
          %s656 = int_to_ptr.vmem [resolvable:$true] %s655
          %s657 = sshll.u32 %s654, 4
          %s658 = int_to_ptr.hbm [resolvable:$true] %s657
          %663 = dma.vmem_to_hbm [thread:$0]  %s656, 512, %s658, %s632, 64, 64, 4
        $region48: #{tpu_custom_call.1} parent=27 // pred_fallthru
          _
        // Predicated region
        $region49: #{tpu_custom_call.1} parent=27 // pred_check
          %p664 = pneg %p149
        $region50: #{tpu_custom_call.1} parent=27 // pred_check_branch
          %666 = sbr.rel (%p664) target = $region52
        $region51: #{tpu_custom_call.1} parent=27 // pred_region
          %668 = vsyncadd %s637, 0
          %s669 = sadd.s32 %s32, %s31
          %s670 = smul.addr %s669, 8
          %s671 = scalar_lea.hbm %s3, %s670
          %s673 = sshll.u32 %s640, 4
          %s674 = int_to_ptr.vmem [resolvable:$true] %s673
          %s675 = sshll.u32 %s671, 4
          %s676 = int_to_ptr.hbm [resolvable:$true] %s675
          %678 = dma.vmem_to_hbm [thread:$0]  %s674, 128, %s676, %s637
        $region52: #{tpu_custom_call.1} parent=27 // pred_fallthru
          _
        // Predicated region
        $region53: #{tpu_custom_call.1} parent=27 // pred_check
          %p679 = pneg %p177
        $region54: #{tpu_custom_call.1} parent=27 // pred_check_branch
          %681 = sbr.rel (%p679) target = $region56
        $region55: #{tpu_custom_call.1} parent=27 // pred_region
          %683 = vsyncadd %s642, 0
          %s684 = sadd.s32 %s32, %s31
          %s685 = smul.addr %s684, 8
          %s686 = scalar_lea.hbm %s4, %s685
          %s688 = sshll.u32 %s645, 4
          %s689 = int_to_ptr.vmem [resolvable:$true] %s688
          %s690 = sshll.u32 %s686, 4
          %s691 = int_to_ptr.hbm [resolvable:$true] %s690
          %693 = dma.vmem_to_hbm [thread:$0]  %s689, 128, %s691, %s642
        $region56: #{tpu_custom_call.1} parent=27 // pred_fallthru
          _
      $region28: #{tpu_custom_call.1} parent=5 // pred_fallthru
        _
      %p694 = scmp.le.s32.totalorder 2, %s21
      // Predicated region
      $region57: #{tpu_custom_call.1} parent=5 // pred_check
        %p695 = pneg %p694
      $region58: #{tpu_custom_call.1} parent=5 // pred_check_branch
        %697 = sbr.rel (%p695) target = $region60
      $region59: #{tpu_custom_call.1} parent=5 // pred_region
        %s698 = ssub.s32 %s21, 2
        // Predicated region
        $region61: #{tpu_custom_call.1} parent=59 // pred_check
          %p699 = pneg %p127
        $region62: #{tpu_custom_call.1} parent=59 // pred_check_branch
          %701 = sbr.rel (%p699) target = $region64
        $region63: #{tpu_custom_call.1} parent=59 // pred_region
          %s702 = sand.u32 %s112, 1
          %s703 = scalar_lea.sflag [#allocation5], %s702
          %s704 = sand.u32 %s112, 1
          %s705 = smul.addr %s704, 32
          %s706 = scalar_lea.vmem [#allocation8], %s705
          %708 = dma.done %s703, 512
        $region64: #{tpu_custom_call.1} parent=59 // pred_fallthru
          _
        // Predicated region
        $region65: #{tpu_custom_call.1} parent=59 // pred_check
          %p709 = pneg %p155
        $region66: #{tpu_custom_call.1} parent=59 // pred_check_branch
          %711 = sbr.rel (%p709) target = $region68
        $region67: #{tpu_custom_call.1} parent=59 // pred_region
          %s712 = sand.u32 %s27, 1
          %s713 = scalar_lea.sflag [#allocation10], %s712
          %s714 = sand.u32 %s140, 1
          %s715 = smul.addr %s714, 8
          %s716 = scalar_lea.vmem [#allocation9], %s715
          %718 = dma.done %s713, 128
        $region68: #{tpu_custom_call.1} parent=59 // pred_fallthru
          _
        // Predicated region
        $region69: #{tpu_custom_call.1} parent=59 // pred_check
          %p719 = pneg %p183
        $region70: #{tpu_custom_call.1} parent=59 // pred_check_branch
          %721 = sbr.rel (%p719) target = $region72
        $region71: #{tpu_custom_call.1} parent=59 // pred_region
          %s722 = sand.u32 %s27, 1
          %s723 = scalar_lea.sflag [#allocation10], %s722
          %s724 = sand.u32 %s168, 1
          %s725 = smul.addr %s724, 8
          %s726 = scalar_lea.vmem [#allocation11], %s725
          %728 = dma.done %s723, 128
        $region72: #{tpu_custom_call.1} parent=59 // pred_fallthru
          _
      $region60: #{tpu_custom_call.1} parent=5 // pred_fallthru
        _
    $region6: #{tpu_custom_call.1} parent=1 // loop_footer
      %s25 = sadd.s32 1, %s21
    $region7: #{tpu_custom_call.1} parent=1 // loop_footer_branch
      %20 = sbr.rel target = $region3
    $region8: #{tpu_custom_call.1} parent=1 // loop_exit
      _
    %729 = vsyncpa [#allocation4], 1
    %s730 = scalar_lea.sflag [#allocation4], 1
    %731 = vsyncpa %s730, 1
    %732 = vsyncpa [#allocation7], 1
    %733 = vsyncpa [#allocation5], 1
    %s734 = scalar_lea.sflag [#allocation5], 1
    %735 = vsyncpa %s734, 1
    %736 = vsyncpa [#allocation10], 1
    %s737 = scalar_lea.sflag [#allocation10], 1
    %738 = vsyncpa %s737, 1

</llo_original>
